<compile_context>
chip_gen: v7x
topology: tpu7x:2x2x1
jax: 0.10.0
libtpu: 0.0.40
codegen_flags: <defaults>
</compile_context>

<pallas_src>
import jax
import jax.numpy as jnp
from jax.experimental import pallas as pl
from jax.experimental.pallas import tpu as pltpu

LANE = 128


def _round_up(x, m):
    return (x + m - 1) // m * m


def mlp_kernel(x_ref,
               w1_ref, b1_ref,
               w2_ref, b2_ref,
               w3_ref, b3_ref,
               w4_ref, b4_ref,
               o_ref):
    # Fully fused forward pass for one batch tile; all weights are VMEM-resident.
    x = x_ref[...]  # already bf16

    h = jnp.dot(x, w1_ref[...], preferred_element_type=jnp.float32) + b1_ref[...]
    h = jnp.maximum(h, 0.0).astype(jnp.bfloat16)

    h = jnp.dot(h, w2_ref[...], preferred_element_type=jnp.float32) + b2_ref[...]
    h = jnp.maximum(h, 0.0).astype(jnp.bfloat16)

    h = jnp.dot(h, w3_ref[...], preferred_element_type=jnp.float32) + b3_ref[...]
    h = jnp.maximum(h, 0.0).astype(jnp.bfloat16)

    out = jnp.dot(h, w4_ref[...], preferred_element_type=jnp.float32) + b4_ref[...]
    o_ref[...] = out.astype(o_ref.dtype)


def init_params(key, input_size, hidden_size, output_size):
    """Deterministic init mimicking PyTorch nn.Linear default (uniform +-1/sqrt(fan_in)).
    Weights stored pre-transposed as (in_features, out_features)."""
    dims = [(input_size, hidden_size),
            (hidden_size, hidden_size),
            (hidden_size, hidden_size),
            (hidden_size, output_size)]
    params = {}
    for i, (fan_in, fan_out) in enumerate(dims, start=1):
        key, kw, kb = jax.random.split(key, 3)
        bound = 1.0 / (fan_in ** 0.5)
        params[f"w{i}"] = jax.random.uniform(
            kw, (fan_in, fan_out), jnp.float32, -bound, bound)
        params[f"b{i}"] = jax.random.uniform(
            kb, (1, fan_out), jnp.float32, -bound, bound)
    return params


def prepare_params(params):
    """Zero-pad hidden/output feature dims to lane multiples and cast weights to
    bf16 (once).  The input feature dim is left at its real width."""
    in_dim, hid = params["w1"].shape
    out_dim = params["w4"].shape[1]
    hid_p = _round_up(hid, LANE)
    out_p = _round_up(out_dim, LANE)

    def pad2(a, rows, cols):
        return jnp.pad(a, ((0, rows - a.shape[0]), (0, cols - a.shape[1])))

    prepped = {
        "w1": pad2(params["w1"], in_dim, hid_p).astype(jnp.bfloat16),
        "b1": pad2(params["b1"], 1, hid_p),
        "w2": pad2(params["w2"], hid_p, hid_p).astype(jnp.bfloat16),
        "b2": pad2(params["b2"], 1, hid_p),
        "w3": pad2(params["w3"], hid_p, hid_p).astype(jnp.bfloat16),
        "b3": pad2(params["b3"], 1, hid_p),
        "w4": pad2(params["w4"], hid_p, out_p).astype(jnp.bfloat16),
        "b4": pad2(params["b4"], 1, out_p),
    }
    dims = (in_dim, out_dim, hid_p, out_p)
    return prepped, dims


def feed_forward_net(x, prepped, dims, *, block_b=2048):
    """x: (B, input_size) float32. prepped/dims from prepare_params."""
    in_dim, out_dim, hid_p, out_p = dims
    B = x.shape[0]

    # Minimal sublane pad (<= 7 rows), then choose the number of batch tiles.
    B8 = _round_up(B, 8)
    n_tiles = pl.cdiv(B8, block_b)
    # v7x has 2 TensorCores: give the "parallel" batch axis >= 2 grid steps to
    # shard across, whenever there is enough work to make splitting worthwhile.
    if n_tiles == 1 and B8 >= 512:
        n_tiles = 2
    TB = _round_up(pl.cdiv(B8, n_tiles), 8)
    B_pad = n_tiles * TB  # total batch padding stays tiny (O(n_tiles * 8) rows)

    # Pad-and-cast the input in one fused op: bf16, real feature width.
    x_p = jnp.pad(x.astype(jnp.bfloat16), ((0, B_pad - B), (0, 0)))

    grid = (n_tiles,)

    def act_spec(cols):
        return pl.BlockSpec((TB, cols), lambda i: (i, 0))

    def const_spec(shape):
        return pl.BlockSpec(shape, lambda i: (0, 0))

    args = (x_p,
            prepped["w1"], prepped["b1"],
            prepped["w2"], prepped["b2"],
            prepped["w3"], prepped["b3"],
            prepped["w4"], prepped["b4"])

    flops = 2 * B_pad * (in_dim * hid_p + 2 * hid_p * hid_p + hid_p * out_p)
    bytes_accessed = (int(x_p.size) * 2
                      + sum(int(a.size) * a.dtype.itemsize for a in args[1:])
                      + B_pad * out_p * 2)

    out = pl.pallas_call(
        mlp_kernel,
        out_shape=jax.ShapeDtypeStruct((B_pad, out_p), jnp.bfloat16),
        grid=grid,
        in_specs=[act_spec(in_dim),
                  const_spec((in_dim, hid_p)), const_spec((1, hid_p)),
                  const_spec((hid_p, hid_p)), const_spec((1, hid_p)),
                  const_spec((hid_p, hid_p)), const_spec((1, hid_p)),
                  const_spec((hid_p, out_p)), const_spec((1, out_p))],
        out_specs=act_spec(out_p),
        compiler_params=pltpu.CompilerParams(
            dimension_semantics=("parallel",),
            vmem_limit_bytes=32 * 1024 * 1024),
        cost_estimate=pl.CostEstimate(
            flops=flops, transcendentals=0, bytes_accessed=bytes_accessed),
    )(*args)

    # Slice off batch / lane padding -> (B, output_size), back to f32.
    return out[:B, :out_dim].astype(jnp.float32)


def reference_forward(x, params):
    h = x
    for i in range(1, 4):
        h = jnp.maximum(h @ params[f"w{i}"] + params[f"b{i}"], 0.0)
    return h @ params["w4"] + params["b4"]


if __name__ == "__main__":
    input_size = 64
    hidden_size = 200
    output_size = 10
    batch = 8

    key = jax.random.PRNGKey(0)
    key, kx = jax.random.split(key)
    x = jax.random.normal(kx, (batch, input_size), jnp.float32)
    params = init_params(key, input_size, hidden_size, output_size)

    prepped, dims = prepare_params(params)

    fwd = jax.jit(lambda xx, pp: feed_forward_net(xx, pp, dims))
    out = jax.block_until_ready(fwd(x, prepped))

    ref = reference_forward(x, params)
    assert out.shape == (batch, output_size)
    # bf16 MXU operands + bf16 output store (f32 accumulation) -> loosen
    # tolerance vs the pure-f32 reference.
    assert jnp.allclose(out, ref, atol=5e-2, rtol=5e-2), (
        f"max abs diff = {jnp.max(jnp.abs(out - ref))}")

    print("KERNEL_OK")
</pallas_src>

<mosaic_0001>
module attributes {stable_mosaic.version = 11 : i64} {
  func.func @mlp_kernel(%arg0: i32, %arg1: memref<8x64xbf16, #tpu.memory_space<vmem>>, %arg2: memref<64x256xbf16, #tpu.memory_space<vmem>>, %arg3: memref<1x256xf32, #tpu.memory_space<vmem>>, %arg4: memref<256x256xbf16, #tpu.memory_space<vmem>>, %arg5: memref<1x256xf32, #tpu.memory_space<vmem>>, %arg6: memref<256x256xbf16, #tpu.memory_space<vmem>>, %arg7: memref<1x256xf32, #tpu.memory_space<vmem>>, %arg8: memref<256x128xbf16, #tpu.memory_space<vmem>>, %arg9: memref<1x128xf32, #tpu.memory_space<vmem>>, %arg10: memref<8x128xbf16, #tpu.memory_space<vmem>>) attributes {dimension_semantics = [#tpu.dimension_semantics<parallel>], iteration_bounds = array<i64: 1>, scalar_prefetch = 0 : i64, scratch_operands = 0 : i64, tpu.core_type = #tpu.core_type<tc>, window_params = [{transform_indices = @transform_0, window_bounds = array<i64: 8, 64>}, {pipeline_mode = #tpu.pipeline_mode<synchronous>, transform_indices = @transform_1, window_bounds = array<i64: 64, 256>}, {pipeline_mode = #tpu.pipeline_mode<synchronous>, transform_indices = @transform_2, window_bounds = array<i64: 1, 256>}, {pipeline_mode = #tpu.pipeline_mode<synchronous>, transform_indices = @transform_3, window_bounds = array<i64: 256, 256>}, {pipeline_mode = #tpu.pipeline_mode<synchronous>, transform_indices = @transform_4, window_bounds = array<i64: 1, 256>}, {pipeline_mode = #tpu.pipeline_mode<synchronous>, transform_indices = @transform_5, window_bounds = array<i64: 256, 256>}, {pipeline_mode = #tpu.pipeline_mode<synchronous>, transform_indices = @transform_6, window_bounds = array<i64: 1, 256>}, {pipeline_mode = #tpu.pipeline_mode<synchronous>, transform_indices = @transform_7, window_bounds = array<i64: 256, 128>}, {pipeline_mode = #tpu.pipeline_mode<synchronous>, transform_indices = @transform_8, window_bounds = array<i64: 1, 128>}, {transform_indices = @transform_9, window_bounds = array<i64: 8, 128>}]} {
    %c0 = arith.constant 0 : index
    %c0_0 = arith.constant 0 : index
    %0 = vector.load %arg1[%c0, %c0_0] : memref<8x64xbf16, #tpu.memory_space<vmem>>, vector<8x64xbf16>
    %c0_1 = arith.constant 0 : index
    %c0_2 = arith.constant 0 : index
    %1 = vector.load %arg2[%c0_1, %c0_2] : memref<64x256xbf16, #tpu.memory_space<vmem>>, vector<64x256xbf16>
    %cst = arith.constant dense<0.000000e+00> : vector<8x256xf32>
    %2 = tpu.matmul %0, %1, %cst {dimension_numbers = #tpu.dot_dimension_numbers<[1], [0], [0], [1], [0, 0, 1, 1], [], []>} : vector<8x64xbf16>, vector<64x256xbf16>, vector<8x256xf32> -> vector<8x256xf32>
    %c0_3 = arith.constant 0 : index
    %c0_4 = arith.constant 0 : index
    %3 = vector.load %arg3[%c0_3, %c0_4] : memref<1x256xf32, #tpu.memory_space<vmem>>, vector<1x256xf32>
    %4 = vector.broadcast %3 : vector<1x256xf32> to vector<8x256xf32>
    %5 = arith.addf %2, %4 : vector<8x256xf32>
    %cst_5 = arith.constant 0.000000e+00 : f32
    %6 = vector.broadcast %cst_5 : f32 to vector<8x256xf32>
    %7 = arith.maximumf %5, %6 : vector<8x256xf32>
    %8 = arith.truncf %7 : vector<8x256xf32> to vector<8x256xbf16>
    %c0_6 = arith.constant 0 : index
    %c0_7 = arith.constant 0 : index
    %9 = vector.load %arg4[%c0_6, %c0_7] : memref<256x256xbf16, #tpu.memory_space<vmem>>, vector<256x256xbf16>
    %cst_8 = arith.constant dense<0.000000e+00> : vector<8x256xf32>
    %10 = tpu.matmul %8, %9, %cst_8 {dimension_numbers = #tpu.dot_dimension_numbers<[1], [0], [0], [1], [0, 0, 1, 1], [], []>} : vector<8x256xbf16>, vector<256x256xbf16>, vector<8x256xf32> -> vector<8x256xf32>
    %c0_9 = arith.constant 0 : index
    %c0_10 = arith.constant 0 : index
    %11 = vector.load %arg5[%c0_9, %c0_10] : memref<1x256xf32, #tpu.memory_space<vmem>>, vector<1x256xf32>
    %12 = vector.broadcast %11 : vector<1x256xf32> to vector<8x256xf32>
    %13 = arith.addf %10, %12 : vector<8x256xf32>
    %cst_11 = arith.constant 0.000000e+00 : f32
    %14 = vector.broadcast %cst_11 : f32 to vector<8x256xf32>
    %15 = arith.maximumf %13, %14 : vector<8x256xf32>
    %16 = arith.truncf %15 : vector<8x256xf32> to vector<8x256xbf16>
    %c0_12 = arith.constant 0 : index
    %c0_13 = arith.constant 0 : index
    %17 = vector.load %arg6[%c0_12, %c0_13] : memref<256x256xbf16, #tpu.memory_space<vmem>>, vector<256x256xbf16>
    %cst_14 = arith.constant dense<0.000000e+00> : vector<8x256xf32>
    %18 = tpu.matmul %16, %17, %cst_14 {dimension_numbers = #tpu.dot_dimension_numbers<[1], [0], [0], [1], [0, 0, 1, 1], [], []>} : vector<8x256xbf16>, vector<256x256xbf16>, vector<8x256xf32> -> vector<8x256xf32>
    %c0_15 = arith.constant 0 : index
    %c0_16 = arith.constant 0 : index
    %19 = vector.load %arg7[%c0_15, %c0_16] : memref<1x256xf32, #tpu.memory_space<vmem>>, vector<1x256xf32>
    %20 = vector.broadcast %19 : vector<1x256xf32> to vector<8x256xf32>
    %21 = arith.addf %18, %20 : vector<8x256xf32>
    %cst_17 = arith.constant 0.000000e+00 : f32
    %22 = vector.broadcast %cst_17 : f32 to vector<8x256xf32>
    %23 = arith.maximumf %21, %22 : vector<8x256xf32>
    %24 = arith.truncf %23 : vector<8x256xf32> to vector<8x256xbf16>
    %c0_18 = arith.constant 0 : index
    %c0_19 = arith.constant 0 : index
    %25 = vector.load %arg8[%c0_18, %c0_19] : memref<256x128xbf16, #tpu.memory_space<vmem>>, vector<256x128xbf16>
    %cst_20 = arith.constant dense<0.000000e+00> : vector<8x128xf32>
    %26 = tpu.matmul %24, %25, %cst_20 {dimension_numbers = #tpu.dot_dimension_numbers<[1], [0], [0], [1], [0, 0, 1, 1], [], []>} : vector<8x256xbf16>, vector<256x128xbf16>, vector<8x128xf32> -> vector<8x128xf32>
    %c0_21 = arith.constant 0 : index
    %c0_22 = arith.constant 0 : index
    %27 = vector.load %arg9[%c0_21, %c0_22] : memref<1x128xf32, #tpu.memory_space<vmem>>, vector<1x128xf32>
    %28 = vector.broadcast %27 : vector<1x128xf32> to vector<8x128xf32>
    %29 = arith.addf %26, %28 : vector<8x128xf32>
    %30 = arith.truncf %29 : vector<8x128xf32> to vector<8x128xbf16>
    %c0_23 = arith.constant 0 : index
    %c0_24 = arith.constant 0 : index
    %31 = vector.load %arg10[%c0_23, %c0_24] : memref<8x128xbf16, #tpu.memory_space<vmem>>, vector<8x128xbf16>
    tpu.vector_store %arg10[%c0_23, %c0_24], %30 {strides = array<i32>} : memref<8x128xbf16, #tpu.memory_space<vmem>>, vector<8x128xbf16>,
    return
  }
  func.func @transform_0(%arg0: i32) -> (i32, i32) {
    %c0_i32 = arith.constant 0 : i32
    %c0_i32_0 = arith.constant 0 : i32
    return %arg0, %c0_i32 : i32, i32
  }
  func.func @transform_1(%arg0: i32) -> (i32, i32) {
    %c0_i32 = arith.constant 0 : i32
    %c0_i32_0 = arith.constant 0 : i32
    %c0_i32_1 = arith.constant 0 : i32
    return %c0_i32, %c0_i32_0 : i32, i32
  }
  func.func @transform_2(%arg0: i32) -> (i32, i32) {
    %c0_i32 = arith.constant 0 : i32
    %c0_i32_0 = arith.constant 0 : i32
    %c0_i32_1 = arith.constant 0 : i32
    return %c0_i32, %c0_i32_0 : i32, i32
  }
  func.func @transform_3(%arg0: i32) -> (i32, i32) {
    %c0_i32 = arith.constant 0 : i32
    %c0_i32_0 = arith.constant 0 : i32
    %c0_i32_1 = arith.constant 0 : i32
    return %c0_i32, %c0_i32_0 : i32, i32
  }
  func.func @transform_4(%arg0: i32) -> (i32, i32) {
    %c0_i32 = arith.constant 0 : i32
    %c0_i32_0 = arith.constant 0 : i32
    %c0_i32_1 = arith.constant 0 : i32
    return %c0_i32, %c0_i32_0 : i32, i32
  }
  func.func @transform_5(%arg0: i32) -> (i32, i32) {
    %c0_i32 = arith.constant 0 : i32
    %c0_i32_0 = arith.constant 0 : i32
    %c0_i32_1 = arith.constant 0 : i32
    return %c0_i32, %c0_i32_0 : i32, i32
  }
  func.func @transform_6(%arg0: i32) -> (i32, i32) {
    %c0_i32 = arith.constant 0 : i32
    %c0_i32_0 = arith.constant 0 : i32
    %c0_i32_1 = arith.constant 0 : i32
    return %c0_i32, %c0_i32_0 : i32, i32
  }
  func.func @transform_7(%arg0: i32) -> (i32, i32) {
    %c0_i32 = arith.constant 0 : i32
    %c0_i32_0 = arith.constant 0 : i32
    %c0_i32_1 = arith.constant 0 : i32
    return %c0_i32, %c0_i32_0 : i32, i32
  }
  func.func @transform_8(%arg0: i32) -> (i32, i32) {
    %c0_i32 = arith.constant 0 : i32
    %c0_i32_0 = arith.constant 0 : i32
    %c0_i32_1 = arith.constant 0 : i32
    return %c0_i32, %c0_i32_0 : i32, i32
  }
  func.func @transform_9(%arg0: i32) -> (i32, i32) {
    %c0_i32 = arith.constant 0 : i32
    %c0_i32_0 = arith.constant 0 : i32
    return %arg0, %c0_i32 : i32, i32
  }
}

</mosaic_0001>

<llo_original>
// kernel: _lambda_.1
$region0: #{_lambda_.1}
  #allocation0 [shape = 'u32[]', space=smem, size = 0x4, offset = 0x4, fixed_abs, tag = 'smem constant byte address 0x4 - core index']
  #allocation1 [shape = 'u32[144,128]{1,0:T(1,128)}', space=vmem, size = 0x12000, scoped, tag = 'internal scratch']
  %s0 = inlined_call_operand.vmem [shape: bf16[8,64], index: 0, kind: input, shape index: {}]
  %s1 = inlined_call_operand.hbm [shape: bf16[64,256], index: 1, kind: input, shape index: {}]
  %s2 = inlined_call_operand.vmem [shape: f32[1,256], index: 2, kind: input, shape index: {}]
  %s3 = inlined_call_operand.hbm [shape: bf16[256,256], index: 3, kind: input, shape index: {}]
  %s4 = inlined_call_operand.vmem [shape: f32[1,256], index: 4, kind: input, shape index: {}]
  %s5 = inlined_call_operand.hbm [shape: bf16[256,256], index: 5, kind: input, shape index: {}]
  %s6 = inlined_call_operand.vmem [shape: f32[1,256], index: 6, kind: input, shape index: {}]
  %s7 = inlined_call_operand.hbm [shape: bf16[256,128], index: 7, kind: input, shape index: {}]
  %s8 = inlined_call_operand.vmem [shape: f32[1,128], index: 8, kind: input, shape index: {}]
  %s9 = inlined_call_operand.vmem [shape: bf16[8,128], index: 9, kind: output, shape index: {}]
  %s10 = sld [smem:[#allocation0]]
  $region62: #{_lambda_.1} parent=0
    _
  %s12 = ssub.s32 1, %s10
  %s13 = scalar_select 0, %s12, %s10
  $region1: #{_lambda_.1} parent=0
    #allocation2 [shape = 'u8[32768]{0}', space=vmem, size = 0x8000, scoped, tag = 'input window, operand 1, single buffered']
    #allocation3 [shape = 's32[1]{0}', space=sflag, size = 0x4, scoped, tag = 'scoped memory for _lambda_.1']
    #allocation4 [shape = 'u8[131072]{0}', space=vmem, size = 0x20000, scoped, tag = 'input window, operand 3, single buffered']
    #allocation5 [shape = 's32[1]{0}', space=sflag, size = 0x4, scoped, tag = 'scoped memory for _lambda_.1']
    #allocation6 [shape = 'u8[131072]{0}', space=vmem, size = 0x20000, scoped, tag = 'input window, operand 5, single buffered']
    #allocation7 [shape = 'u8[65536]{0}', space=vmem, size = 0x10000, scoped, tag = 'input window, operand 7, single buffered']
    #allocation8 [shape = 's32[1]{0}', space=sflag, size = 0x4, scoped, tag = 'scoped memory for _lambda_.1']
    %14 = vsyncpa [#allocation3], 0
    %15 = vsyncpa [#allocation5], 0
    %16 = vsyncpa [#allocation8], 0
    // Predicated region
    $region2: #{_lambda_.1} parent=1 // pred_check
      _
    $region3: #{_lambda_.1} parent=1 // pred_check_branch
      %18 = sbr.rel (0) target = $region5
    $region4: #{_lambda_.1} parent=1 // pred_region
      _
    $region5: #{_lambda_.1} parent=1 // pred_fallthru
      _
    // Predicated region
    $region6: #{_lambda_.1} parent=1 // pred_check
      _
    $region7: #{_lambda_.1} parent=1 // pred_check_branch
      %20 = sbr.rel (0) target = $region9
    $region8: #{_lambda_.1} parent=1 // pred_region
      %s22 = ssub.s32 1024, 1024
      %23 = vsyncadd [#allocation3], %s22
      %s24 = sshll.u32 [#allocation2], 4
      %s25 = int_to_ptr.vmem [resolvable:$true] %s24
      %30 = dma.hbm_to_vmem [thread:$0]  %s1, 1024, %s25, [#allocation3], 128, 128, 8
    $region9: #{_lambda_.1} parent=1 // pred_fallthru
      _
    // Predicated region
    $region10: #{_lambda_.1} parent=1 // pred_check
      _
    $region11: #{_lambda_.1} parent=1 // pred_check_branch
      %32 = sbr.rel (0) target = $region13
    $region12: #{_lambda_.1} parent=1 // pred_region
      _
    $region13: #{_lambda_.1} parent=1 // pred_fallthru
      _
    // Predicated region
    $region14: #{_lambda_.1} parent=1 // pred_check
      _
    $region15: #{_lambda_.1} parent=1 // pred_check_branch
      %34 = sbr.rel (0) target = $region17
    $region16: #{_lambda_.1} parent=1 // pred_region
      %s36 = ssub.s32 4096, 4096
      %37 = vsyncadd [#allocation5], %s36
      %s38 = sshll.u32 [#allocation4], 4
      %s39 = int_to_ptr.vmem [resolvable:$true] %s38
      %44 = dma.hbm_to_vmem [thread:$0]  %s3, 4096, %s39, [#allocation5], 128, 128, 8
    $region17: #{_lambda_.1} parent=1 // pred_fallthru
      _
    // Predicated region
    $region18: #{_lambda_.1} parent=1 // pred_check
      _
    $region19: #{_lambda_.1} parent=1 // pred_check_branch
      %46 = sbr.rel (0) target = $region21
    $region20: #{_lambda_.1} parent=1 // pred_region
      _
    $region21: #{_lambda_.1} parent=1 // pred_fallthru
      _
    // Predicated region
    $region22: #{_lambda_.1} parent=1 // pred_check
      _
    $region23: #{_lambda_.1} parent=1 // pred_check_branch
      %48 = sbr.rel (0) target = $region25
    $region24: #{_lambda_.1} parent=1 // pred_region
      %s50 = ssub.s32 4096, 4096
      %51 = vsyncadd [#allocation5], %s50
      %s52 = sshll.u32 [#allocation6], 4
      %s53 = int_to_ptr.vmem [resolvable:$true] %s52
      %58 = dma.hbm_to_vmem [thread:$0]  %s5, 4096, %s53, [#allocation5], 128, 128, 8
    $region25: #{_lambda_.1} parent=1 // pred_fallthru
      _
    // Predicated region
    $region26: #{_lambda_.1} parent=1 // pred_check
      _
    $region27: #{_lambda_.1} parent=1 // pred_check_branch
      %60 = sbr.rel (0) target = $region29
    $region28: #{_lambda_.1} parent=1 // pred_region
      _
    $region29: #{_lambda_.1} parent=1 // pred_fallthru
      _
    // Predicated region
    $region30: #{_lambda_.1} parent=1 // pred_check
      _
    $region31: #{_lambda_.1} parent=1 // pred_check_branch
      %62 = sbr.rel (0) target = $region33
    $region32: #{_lambda_.1} parent=1 // pred_region
      %s64 = ssub.s32 2048, 2048
      %65 = vsyncadd [#allocation8], %s64
      %s66 = sshll.u32 [#allocation7], 4
      %s67 = int_to_ptr.vmem [resolvable:$true] %s66
      %72 = dma.hbm_to_vmem [thread:$0]  %s7, 2048, %s67, [#allocation8], 64, 64, 4
    $region33: #{_lambda_.1} parent=1 // pred_fallthru
      _
    // Predicated region
    $region34: #{_lambda_.1} parent=1 // pred_check
      _
    $region35: #{_lambda_.1} parent=1 // pred_check_branch
      %74 = sbr.rel (0) target = $region37
    $region36: #{_lambda_.1} parent=1 // pred_region
      _
    $region37: #{_lambda_.1} parent=1 // pred_fallthru
      _
    // Predicated region
    $region38: #{_lambda_.1} parent=1 // pred_check
      _
    $region39: #{_lambda_.1} parent=1 // pred_check_branch
      %76 = sbr.rel (0) target = $region41
    $region40: #{_lambda_.1} parent=1 // pred_region
      %77 = dma.done [#allocation3], 1024
    $region41: #{_lambda_.1} parent=1 // pred_fallthru
      _
    // Predicated region
    $region42: #{_lambda_.1} parent=1 // pred_check
      _
    $region43: #{_lambda_.1} parent=1 // pred_check_branch
      %79 = sbr.rel (0) target = $region45
    $region44: #{_lambda_.1} parent=1 // pred_region
      %80 = dma.done [#allocation5], 4096
    $region45: #{_lambda_.1} parent=1 // pred_fallthru
      _
    // Predicated region
    $region46: #{_lambda_.1} parent=1 // pred_check
      _
    $region47: #{_lambda_.1} parent=1 // pred_check_branch
      %82 = sbr.rel (0) target = $region49
    $region48: #{_lambda_.1} parent=1 // pred_region
      %83 = dma.done [#allocation5], 4096
    $region49: #{_lambda_.1} parent=1 // pred_fallthru
      _
    // Predicated region
    $region50: #{_lambda_.1} parent=1 // pred_check
      _
    $region51: #{_lambda_.1} parent=1 // pred_check_branch
      %85 = sbr.rel (0) target = $region53
    $region52: #{_lambda_.1} parent=1 // pred_region
      %86 = dma.done [#allocation8], 2048
    $region53: #{_lambda_.1} parent=1 // pred_fallthru
      _
    %v88 = vld [vmem:[%s0] sm:$0xf]
    %v89 = vld [vmem:[#allocation2] sm:$0xff]
    %v90 = vld [vmem:[#allocation2 + $0x8] sm:$0xff]
    %v91 = vld [vmem:[#allocation2 + $0x10] sm:$0xff]
    %v92 = vld [vmem:[#allocation2 + $0x18] sm:$0xff]
    %v93 = vld [vmem:[#allocation2 + $0x20] sm:$0xff]
    %v94 = vld [vmem:[#allocation2 + $0x28] sm:$0xff]
    %v95 = vld [vmem:[#allocation2 + $0x30] sm:$0xff]
    %v96 = vld [vmem:[#allocation2 + $0x38] sm:$0xff]
    %v97 = vld [vmem:[%s2] sm:$0x3]
    %v99 = vlaneseq
    %v100 = vshrl.u32 %v99, 7
    %v101 = vsub.s32 0, %v100
    %v102 = vrot.slane %v97, %v101
    %v103 = vlaneseq
    %v104 = vshrl.u32 %v103, 7
    %v105 = vsub.s32 1, %v104
    %v106 = vrot.slane %v97, %v105
    %v117 = vunpack.c.l.b16 %v89
    %v118 = vunpack.c.h.b16 %v89
    %v119 = vunpack.c.l.b16 %v90
    %v120 = vunpack.c.h.b16 %v90
    %v121 = vunpack.c.l.b16 %v91
    %v122 = vunpack.c.h.b16 %v91
    %v123 = vunpack.c.l.b16 %v92
    %v124 = vunpack.c.h.b16 %v92
    %v125 = vunpack.c.l.b16 %v93
    %v126 = vunpack.c.h.b16 %v93
    %v127 = vunpack.c.l.b16 %v94
    %v128 = vunpack.c.h.b16 %v94
    %v129 = vunpack.c.l.b16 %v95
    %v130 = vunpack.c.h.b16 %v95
    %v131 = vunpack.c.l.b16 %v96
    %v132 = vunpack.c.h.b16 %v96
    %v133 = vpack.c.b16 %v119, %v117
    %v134 = vpack.c.b16 %v120, %v118
    %v135 = vpack.c.b16 %v123, %v121
    %v136 = vpack.c.b16 %v124, %v122
    %v137 = vpack.c.b16 %v127, %v125
    %v138 = vpack.c.b16 %v128, %v126
    %v139 = vpack.c.b16 %v131, %v129
    %v140 = vpack.c.b16 %v132, %v130
    %vm149 = vcmask 523264
    %v151 = vsel %vm149, %v88, 0
    %153 = vmatprep.subr.bf16.mxu0 %v134
    %154 = vmatpush1.bf16.msra.mxu0 %v133
    %155 = vmatprep.subr.bf16.mxu0 %v136
    %156 = vmatpush1.bf16.msra.mxu0 %v135
    %157 = vmatprep.subr.bf16.mxu0 %v138
    %158 = vmatpush1.bf16.msra.mxu0 %v137
    %159 = vmatprep.subr.bf16.mxu0 %v140
    %160 = vmatpush1.bf16.msra.mxu0 %v139
    %161 = vmatprep.subr.bf16.mxu0 0
    %162 = vmatpush1.bf16.msra.mxu0 0
    %163 = vmatprep.subr.bf16.mxu0 0
    %164 = vmatpush1.bf16.msra.mxu0 0
    %165 = vmatprep.subr.bf16.mxu0 0
    %166 = vmatpush1.bf16.msra.mxu0 0
    %167 = vmatprep.subr.bf16.mxu0 0
    %168 = vmatpush1.bf16.msra.mxu0 0
    %169 = vmatprep.subr.bf16.mxu0 0
    %170 = vmatpush1.bf16.msra.mxu0 0
    %171 = vmatprep.subr.bf16.mxu0 0
    %172 = vmatpush1.bf16.msra.mxu0 0
    %173 = vmatprep.subr.bf16.mxu0 0
    %174 = vmatpush1.bf16.msra.mxu0 0
    %175 = vmatprep.subr.bf16.mxu0 0
    %176 = vmatpush1.bf16.msra.mxu0 0
    %177 = vmatprep.subr.bf16.mxu0 0
    %178 = vmatpush1.bf16.msra.mxu0 0
    %179 = vmatprep.subr.bf16.mxu0 0
    %180 = vmatpush1.bf16.msra.mxu0 0
    %181 = vmatprep.subr.bf16.mxu0 0
    %182 = vmatpush1.bf16.msra.mxu0 0
    %183 = vmatprep.subr.bf16.mxu0 0
    %184 = vmatpush1.bf16.msra.mxu0 0
    %185 = vmatprep.mubr.bf16.mxu0 0
    %186 = vmatmul.mubr.bf16.gmra.mrb[0].mxu0 %v151
    %v187 = vpop.f32.mrb[0].mxu0
    %v188 = vadd.f32 %v102, %v187
    %v189 = vpop.f32.mrb[0].mxu0
    %v190 = vadd.f32 %v106, %v189
    %v191 = vpop.f32.mrb[0].mxu0
    %v192 = vpop.f32.mrb[0].mxu0
    %193 = vdwg.mxu0
    %v194 = vmax.f32 %v188, 0.0
    %v195 = vmax.f32 %v190, 0.0
    %v196 = vpack.c.bf16 %v194, %v194
    %v197 = vpack.c.bf16 %v195, %v195
    %v198 = vld [vmem:[#allocation4] sm:$0xff]
    %v199 = vld [vmem:[#allocation4 + $0x8] sm:$0xff]
    %v200 = vld [vmem:[#allocation4 + $0x10] sm:$0xff]
    %v201 = vld [vmem:[#allocation4 + $0x18] sm:$0xff]
    %v202 = vld [vmem:[#allocation4 + $0x20] sm:$0xff]
    %v203 = vld [vmem:[#allocation4 + $0x28] sm:$0xff]
    %v204 = vld [vmem:[#allocation4 + $0x30] sm:$0xff]
    %v205 = vld [vmem:[#allocation4 + $0x38] sm:$0xff]
    %v206 = vld [vmem:[#allocation4 + $0x40] sm:$0xff]
    %v207 = vld [vmem:[#allocation4 + $0x48] sm:$0xff]
    %v208 = vld [vmem:[#allocation4 + $0x50] sm:$0xff]
    %v209 = vld [vmem:[#allocation4 + $0x58] sm:$0xff]
    %v210 = vld [vmem:[#allocation4 + $0x60] sm:$0xff]
    %v211 = vld [vmem:[#allocation4 + $0x68] sm:$0xff]
    %v212 = vld [vmem:[#allocation4 + $0x70] sm:$0xff]
    %v213 = vld [vmem:[#allocation4 + $0x78] sm:$0xff]
    %v214 = vld [vmem:[#allocation4 + $0x80] sm:$0xff]
    %v215 = vld [vmem:[#allocation4 + $0x88] sm:$0xff]
    %v216 = vld [vmem:[#allocation4 + $0x90] sm:$0xff]
    %v217 = vld [vmem:[#allocation4 + $0x98] sm:$0xff]
    %v218 = vld [vmem:[#allocation4 + $0xa0] sm:$0xff]
    %v219 = vld [vmem:[#allocation4 + $0xa8] sm:$0xff]
    %v220 = vld [vmem:[#allocation4 + $0xb0] sm:$0xff]
    %v221 = vld [vmem:[#allocation4 + $0xb8] sm:$0xff]
    %v222 = vld [vmem:[#allocation4 + $0xc0] sm:$0xff]
    %v223 = vld [vmem:[#allocation4 + $0xc8] sm:$0xff]
    %v224 = vld [vmem:[#allocation4 + $0xd0] sm:$0xff]
    %v225 = vld [vmem:[#allocation4 + $0xd8] sm:$0xff]
    %v226 = vld [vmem:[#allocation4 + $0xe0] sm:$0xff]
    %v227 = vld [vmem:[#allocation4 + $0xe8] sm:$0xff]
    %v228 = vld [vmem:[#allocation4 + $0xf0] sm:$0xff]
    %v229 = vld [vmem:[#allocation4 + $0xf8] sm:$0xff]
    %v230 = vld [vmem:[%s4] sm:$0x3]
    %v232 = vlaneseq
    %v233 = vshrl.u32 %v232, 7
    %v234 = vsub.s32 0, %v233
    %v235 = vrot.slane %v230, %v234
    %v236 = vlaneseq
    %v237 = vshrl.u32 %v236, 7
    %v238 = vsub.s32 1, %v237
    %v239 = vrot.slane %v230, %v238
    %v274 = vunpack.c.l.b16 %v198
    %v275 = vunpack.c.h.b16 %v198
    %v276 = vunpack.c.l.b16 %v199
    %v277 = vunpack.c.h.b16 %v199
    %v278 = vunpack.c.l.b16 %v200
    %v279 = vunpack.c.h.b16 %v200
    %v280 = vunpack.c.l.b16 %v201
    %v281 = vunpack.c.h.b16 %v201
    %v282 = vunpack.c.l.b16 %v202
    %v283 = vunpack.c.h.b16 %v202
    %v284 = vunpack.c.l.b16 %v203
    %v285 = vunpack.c.h.b16 %v203
    %v286 = vunpack.c.l.b16 %v204
    %v287 = vunpack.c.h.b16 %v204
    %v288 = vunpack.c.l.b16 %v205
    %v289 = vunpack.c.h.b16 %v205
    %v290 = vunpack.c.l.b16 %v206
    %v291 = vunpack.c.h.b16 %v206
    %v292 = vunpack.c.l.b16 %v207
    %v293 = vunpack.c.h.b16 %v207
    %v294 = vunpack.c.l.b16 %v208
    %v295 = vunpack.c.h.b16 %v208
    %v296 = vunpack.c.l.b16 %v209
    %v297 = vunpack.c.h.b16 %v209
    %v298 = vunpack.c.l.b16 %v210
    %v299 = vunpack.c.h.b16 %v210
    %v300 = vunpack.c.l.b16 %v211
    %v301 = vunpack.c.h.b16 %v211
    %v302 = vunpack.c.l.b16 %v212
    %v303 = vunpack.c.h.b16 %v212
    %v304 = vunpack.c.l.b16 %v213
    %v305 = vunpack.c.h.b16 %v213
    %v306 = vunpack.c.l.b16 %v214
    %v307 = vunpack.c.h.b16 %v214
    %v308 = vunpack.c.l.b16 %v215
    %v309 = vunpack.c.h.b16 %v215
    %v310 = vunpack.c.l.b16 %v216
    %v311 = vunpack.c.h.b16 %v216
    %v312 = vunpack.c.l.b16 %v217
    %v313 = vunpack.c.h.b16 %v217
    %v314 = vunpack.c.l.b16 %v218
    %v315 = vunpack.c.h.b16 %v218
    %v316 = vunpack.c.l.b16 %v219
    %v317 = vunpack.c.h.b16 %v219
    %v318 = vunpack.c.l.b16 %v220
    %v319 = vunpack.c.h.b16 %v220
    %v320 = vunpack.c.l.b16 %v221
    %v321 = vunpack.c.h.b16 %v221
    %v322 = vunpack.c.l.b16 %v222
    %v323 = vunpack.c.h.b16 %v222
    %v324 = vunpack.c.l.b16 %v223
    %v325 = vunpack.c.h.b16 %v223
    %v326 = vunpack.c.l.b16 %v224
    %v327 = vunpack.c.h.b16 %v224
    %v328 = vunpack.c.l.b16 %v225
    %v329 = vunpack.c.h.b16 %v225
    %v330 = vunpack.c.l.b16 %v226
    %v331 = vunpack.c.h.b16 %v226
    %v332 = vunpack.c.l.b16 %v227
    %v333 = vunpack.c.h.b16 %v227
    %v334 = vunpack.c.l.b16 %v228
    %v335 = vunpack.c.h.b16 %v228
    %v336 = vunpack.c.l.b16 %v229
    %v337 = vunpack.c.h.b16 %v229
    %v338 = vpack.c.b16 %v276, %v274
    %v339 = vpack.c.b16 %v277, %v275
    %v340 = vpack.c.b16 %v280, %v278
    %v341 = vpack.c.b16 %v281, %v279
    %v342 = vpack.c.b16 %v284, %v282
    %v343 = vpack.c.b16 %v285, %v283
    %v344 = vpack.c.b16 %v288, %v286
    %v345 = vpack.c.b16 %v289, %v287
    %v346 = vpack.c.b16 %v292, %v290
    %v347 = vpack.c.b16 %v293, %v291
    %v348 = vpack.c.b16 %v296, %v294
    %v349 = vpack.c.b16 %v297, %v295
    %v350 = vpack.c.b16 %v300, %v298
    %v351 = vpack.c.b16 %v301, %v299
    %v352 = vpack.c.b16 %v304, %v302
    %v353 = vpack.c.b16 %v305, %v303
    %v354 = vpack.c.b16 %v308, %v306
    %v355 = vpack.c.b16 %v309, %v307
    %v356 = vpack.c.b16 %v312, %v310
    %v357 = vpack.c.b16 %v313, %v311
    %v358 = vpack.c.b16 %v316, %v314
    %v359 = vpack.c.b16 %v317, %v315
    %v360 = vpack.c.b16 %v320, %v318
    %v361 = vpack.c.b16 %v321, %v319
    %v362 = vpack.c.b16 %v324, %v322
    %v363 = vpack.c.b16 %v325, %v323
    %v364 = vpack.c.b16 %v328, %v326
    %v365 = vpack.c.b16 %v329, %v327
    %v366 = vpack.c.b16 %v332, %v330
    %v367 = vpack.c.b16 %v333, %v331
    %v368 = vpack.c.b16 %v336, %v334
    %v369 = vpack.c.b16 %v337, %v335
    %402 = vmatprep.subr.bf16.mxu0 %v339
    %403 = vmatpush1.bf16.msra.mxu0 %v338
    %404 = vmatprep.subr.bf16.mxu0 %v341
    %405 = vmatpush1.bf16.msra.mxu0 %v340
    %406 = vmatprep.subr.bf16.mxu0 %v343
    %407 = vmatpush1.bf16.msra.mxu0 %v342
    %408 = vmatprep.subr.bf16.mxu0 %v345
    %409 = vmatpush1.bf16.msra.mxu0 %v344
    %410 = vmatprep.subr.bf16.mxu0 %v347
    %411 = vmatpush1.bf16.msra.mxu0 %v346
    %412 = vmatprep.subr.bf16.mxu0 %v349
    %413 = vmatpush1.bf16.msra.mxu0 %v348
    %414 = vmatprep.subr.bf16.mxu0 %v351
    %415 = vmatpush1.bf16.msra.mxu0 %v350
    %416 = vmatprep.subr.bf16.mxu0 %v353
    %417 = vmatpush1.bf16.msra.mxu0 %v352
    %418 = vmatprep.subr.bf16.mxu0 %v355
    %419 = vmatpush1.bf16.msra.mxu0 %v354
    %420 = vmatprep.subr.bf16.mxu0 %v357
    %421 = vmatpush1.bf16.msra.mxu0 %v356
    %422 = vmatprep.subr.bf16.mxu0 %v359
    %423 = vmatpush1.bf16.msra.mxu0 %v358
    %424 = vmatprep.subr.bf16.mxu0 %v361
    %425 = vmatpush1.bf16.msra.mxu0 %v360
    %426 = vmatprep.subr.bf16.mxu0 %v363
    %427 = vmatpush1.bf16.msra.mxu0 %v362
    %428 = vmatprep.subr.bf16.mxu0 %v365
    %429 = vmatpush1.bf16.msra.mxu0 %v364
    %430 = vmatprep.subr.bf16.mxu0 %v367
    %431 = vmatpush1.bf16.msra.mxu0 %v366
    %432 = vmatprep.subr.bf16.mxu0 %v369
    %433 = vmatpush1.bf16.msra.mxu0 %v368
    %434 = vmatprep.mubr.bf16.mxu0 %v197
    %435 = vmatmul.mubr.bf16.gmra.mrb[0].mxu0 %v196
    %v436 = vpop.f32.mrb[0].mxu0
    %v437 = vadd.f32 %v235, %v436
    %v438 = vpop.f32.mrb[0].mxu0
    %v439 = vadd.f32 %v239, %v438
    %v440 = vpop.f32.mrb[0].mxu0
    %v441 = vpop.f32.mrb[0].mxu0
    %442 = vdwg.mxu0
    %v443 = vmax.f32 %v437, 0.0
    %v444 = vmax.f32 %v439, 0.0
    %v445 = vpack.c.bf16 %v443, %v443
    %v446 = vpack.c.bf16 %v444, %v444
    %v447 = vld [vmem:[#allocation6] sm:$0xff]
    %v448 = vld [vmem:[#allocation6 + $0x8] sm:$0xff]
    %v449 = vld [vmem:[#allocation6 + $0x10] sm:$0xff]
    %v450 = vld [vmem:[#allocation6 + $0x18] sm:$0xff]
    %v451 = vld [vmem:[#allocation6 + $0x20] sm:$0xff]
    %v452 = vld [vmem:[#allocation6 + $0x28] sm:$0xff]
    %v453 = vld [vmem:[#allocation6 + $0x30] sm:$0xff]
    %v454 = vld [vmem:[#allocation6 + $0x38] sm:$0xff]
    %v455 = vld [vmem:[#allocation6 + $0x40] sm:$0xff]
    %v456 = vld [vmem:[#allocation6 + $0x48] sm:$0xff]
    %v457 = vld [vmem:[#allocation6 + $0x50] sm:$0xff]
    %v458 = vld [vmem:[#allocation6 + $0x58] sm:$0xff]
    %v459 = vld [vmem:[#allocation6 + $0x60] sm:$0xff]
    %v460 = vld [vmem:[#allocation6 + $0x68] sm:$0xff]
    %v461 = vld [vmem:[#allocation6 + $0x70] sm:$0xff]
    %v462 = vld [vmem:[#allocation6 + $0x78] sm:$0xff]
    %v463 = vld [vmem:[#allocation6 + $0x80] sm:$0xff]
    %v464 = vld [vmem:[#allocation6 + $0x88] sm:$0xff]
    %v465 = vld [vmem:[#allocation6 + $0x90] sm:$0xff]
    %v466 = vld [vmem:[#allocation6 + $0x98] sm:$0xff]
    %v467 = vld [vmem:[#allocation6 + $0xa0] sm:$0xff]
    %v468 = vld [vmem:[#allocation6 + $0xa8] sm:$0xff]
    %v469 = vld [vmem:[#allocation6 + $0xb0] sm:$0xff]
    %v470 = vld [vmem:[#allocation6 + $0xb8] sm:$0xff]
    %v471 = vld [vmem:[#allocation6 + $0xc0] sm:$0xff]
    %v472 = vld [vmem:[#allocation6 + $0xc8] sm:$0xff]
    %v473 = vld [vmem:[#allocation6 + $0xd0] sm:$0xff]
    %v474 = vld [vmem:[#allocation6 + $0xd8] sm:$0xff]
    %v475 = vld [vmem:[#allocation6 + $0xe0] sm:$0xff]
    %v476 = vld [vmem:[#allocation6 + $0xe8] sm:$0xff]
    %v477 = vld [vmem:[#allocation6 + $0xf0] sm:$0xff]
    %v478 = vld [vmem:[#allocation6 + $0xf8] sm:$0xff]
    %v479 = vld [vmem:[%s6] sm:$0x3]
    %v481 = vlaneseq
    %v482 = vshrl.u32 %v481, 7
    %v483 = vsub.s32 0, %v482
    %v484 = vrot.slane %v479, %v483
    %v485 = vlaneseq
    %v486 = vshrl.u32 %v485, 7
    %v487 = vsub.s32 1, %v486
    %v488 = vrot.slane %v479, %v487
    %v523 = vunpack.c.l.b16 %v447
    %v524 = vunpack.c.h.b16 %v447
    %v525 = vunpack.c.l.b16 %v448
    %v526 = vunpack.c.h.b16 %v448
    %v527 = vunpack.c.l.b16 %v449
    %v528 = vunpack.c.h.b16 %v449
    %v529 = vunpack.c.l.b16 %v450
    %v530 = vunpack.c.h.b16 %v450
    %v531 = vunpack.c.l.b16 %v451
    %v532 = vunpack.c.h.b16 %v451
    %v533 = vunpack.c.l.b16 %v452
    %v534 = vunpack.c.h.b16 %v452
    %v535 = vunpack.c.l.b16 %v453
    %v536 = vunpack.c.h.b16 %v453
    %v537 = vunpack.c.l.b16 %v454
    %v538 = vunpack.c.h.b16 %v454
    %v539 = vunpack.c.l.b16 %v455
    %v540 = vunpack.c.h.b16 %v455
    %v541 = vunpack.c.l.b16 %v456
    %v542 = vunpack.c.h.b16 %v456
    %v543 = vunpack.c.l.b16 %v457
    %v544 = vunpack.c.h.b16 %v457
    %v545 = vunpack.c.l.b16 %v458
    %v546 = vunpack.c.h.b16 %v458
    %v547 = vunpack.c.l.b16 %v459
    %v548 = vunpack.c.h.b16 %v459
    %v549 = vunpack.c.l.b16 %v460
    %v550 = vunpack.c.h.b16 %v460
    %v551 = vunpack.c.l.b16 %v461
    %v552 = vunpack.c.h.b16 %v461
    %v553 = vunpack.c.l.b16 %v462
    %v554 = vunpack.c.h.b16 %v462
    %v555 = vunpack.c.l.b16 %v463
    %v556 = vunpack.c.h.b16 %v463
    %v557 = vunpack.c.l.b16 %v464
    %v558 = vunpack.c.h.b16 %v464
    %v559 = vunpack.c.l.b16 %v465
    %v560 = vunpack.c.h.b16 %v465
    %v561 = vunpack.c.l.b16 %v466
    %v562 = vunpack.c.h.b16 %v466
    %v563 = vunpack.c.l.b16 %v467
    %v564 = vunpack.c.h.b16 %v467
    %v565 = vunpack.c.l.b16 %v468
    %v566 = vunpack.c.h.b16 %v468
    %v567 = vunpack.c.l.b16 %v469
    %v568 = vunpack.c.h.b16 %v469
    %v569 = vunpack.c.l.b16 %v470
    %v570 = vunpack.c.h.b16 %v470
    %v571 = vunpack.c.l.b16 %v471
    %v572 = vunpack.c.h.b16 %v471
    %v573 = vunpack.c.l.b16 %v472
    %v574 = vunpack.c.h.b16 %v472
    %v575 = vunpack.c.l.b16 %v473
    %v576 = vunpack.c.h.b16 %v473
    %v577 = vunpack.c.l.b16 %v474
    %v578 = vunpack.c.h.b16 %v474
    %v579 = vunpack.c.l.b16 %v475
    %v580 = vunpack.c.h.b16 %v475
    %v581 = vunpack.c.l.b16 %v476
    %v582 = vunpack.c.h.b16 %v476
    %v583 = vunpack.c.l.b16 %v477
    %v584 = vunpack.c.h.b16 %v477
    %v585 = vunpack.c.l.b16 %v478
    %v586 = vunpack.c.h.b16 %v478
    %v587 = vpack.c.b16 %v525, %v523
    %v588 = vpack.c.b16 %v526, %v524
    %v589 = vpack.c.b16 %v529, %v527
    %v590 = vpack.c.b16 %v530, %v528
    %v591 = vpack.c.b16 %v533, %v531
    %v592 = vpack.c.b16 %v534, %v532
    %v593 = vpack.c.b16 %v537, %v535
    %v594 = vpack.c.b16 %v538, %v536
    %v595 = vpack.c.b16 %v541, %v539
    %v596 = vpack.c.b16 %v542, %v540
    %v597 = vpack.c.b16 %v545, %v543
    %v598 = vpack.c.b16 %v546, %v544
    %v599 = vpack.c.b16 %v549, %v547
    %v600 = vpack.c.b16 %v550, %v548
    %v601 = vpack.c.b16 %v553, %v551
    %v602 = vpack.c.b16 %v554, %v552
    %v603 = vpack.c.b16 %v557, %v555
    %v604 = vpack.c.b16 %v558, %v556
    %v605 = vpack.c.b16 %v561, %v559
    %v606 = vpack.c.b16 %v562, %v560
    %v607 = vpack.c.b16 %v565, %v563
    %v608 = vpack.c.b16 %v566, %v564
    %v609 = vpack.c.b16 %v569, %v567
    %v610 = vpack.c.b16 %v570, %v568
    %v611 = vpack.c.b16 %v573, %v571
    %v612 = vpack.c.b16 %v574, %v572
    %v613 = vpack.c.b16 %v577, %v575
    %v614 = vpack.c.b16 %v578, %v576
    %v615 = vpack.c.b16 %v581, %v579
    %v616 = vpack.c.b16 %v582, %v580
    %v617 = vpack.c.b16 %v585, %v583
    %v618 = vpack.c.b16 %v586, %v584
    %651 = vmatprep.subr.bf16.mxu0 %v588
    %652 = vmatpush1.bf16.msra.mxu0 %v587
    %653 = vmatprep.subr.bf16.mxu0 %v590
    %654 = vmatpush1.bf16.msra.mxu0 %v589
    %655 = vmatprep.subr.bf16.mxu0 %v592
    %656 = vmatpush1.bf16.msra.mxu0 %v591
    %657 = vmatprep.subr.bf16.mxu0 %v594
    %658 = vmatpush1.bf16.msra.mxu0 %v593
    %659 = vmatprep.subr.bf16.mxu0 %v596
    %660 = vmatpush1.bf16.msra.mxu0 %v595
    %661 = vmatprep.subr.bf16.mxu0 %v598
    %662 = vmatpush1.bf16.msra.mxu0 %v597
    %663 = vmatprep.subr.bf16.mxu0 %v600
    %664 = vmatpush1.bf16.msra.mxu0 %v599
    %665 = vmatprep.subr.bf16.mxu0 %v602
    %666 = vmatpush1.bf16.msra.mxu0 %v601
    %667 = vmatprep.subr.bf16.mxu0 %v604
    %668 = vmatpush1.bf16.msra.mxu0 %v603
    %669 = vmatprep.subr.bf16.mxu0 %v606
    %670 = vmatpush1.bf16.msra.mxu0 %v605
    %671 = vmatprep.subr.bf16.mxu0 %v608
    %672 = vmatpush1.bf16.msra.mxu0 %v607
    %673 = vmatprep.subr.bf16.mxu0 %v610
    %674 = vmatpush1.bf16.msra.mxu0 %v609
    %675 = vmatprep.subr.bf16.mxu0 %v612
    %676 = vmatpush1.bf16.msra.mxu0 %v611
    %677 = vmatprep.subr.bf16.mxu0 %v614
    %678 = vmatpush1.bf16.msra.mxu0 %v613
    %679 = vmatprep.subr.bf16.mxu0 %v616
    %680 = vmatpush1.bf16.msra.mxu0 %v615
    %681 = vmatprep.subr.bf16.mxu0 %v618
    %682 = vmatpush1.bf16.msra.mxu0 %v617
    %683 = vmatprep.mubr.bf16.mxu0 %v446
    %684 = vmatmul.mubr.bf16.gmra.mrb[0].mxu0 %v445
    %v685 = vpop.f32.mrb[0].mxu0
    %v686 = vadd.f32 %v484, %v685
    %v687 = vpop.f32.mrb[0].mxu0
    %v688 = vadd.f32 %v488, %v687
    %v689 = vpop.f32.mrb[0].mxu0
    %v690 = vpop.f32.mrb[0].mxu0
    %691 = vdwg.mxu0
    %v692 = vmax.f32 %v686, 0.0
    %v693 = vmax.f32 %v688, 0.0
    %v694 = vpack.c.bf16 %v692, %v692
    %v695 = vpack.c.bf16 %v693, %v693
    %v696 = vld [vmem:[#allocation7] sm:$0xf]
    %v697 = vld [vmem:[#allocation7 + $0x4] sm:$0xf]
    %v698 = vld [vmem:[#allocation7 + $0x8] sm:$0xf]
    %v699 = vld [vmem:[#allocation7 + $0xc] sm:$0xf]
    %v700 = vld [vmem:[#allocation7 + $0x10] sm:$0xf]
    %v701 = vld [vmem:[#allocation7 + $0x14] sm:$0xf]
    %v702 = vld [vmem:[#allocation7 + $0x18] sm:$0xf]
    %v703 = vld [vmem:[#allocation7 + $0x1c] sm:$0xf]
    %v704 = vld [vmem:[#allocation7 + $0x20] sm:$0xf]
    %v705 = vld [vmem:[#allocation7 + $0x24] sm:$0xf]
    %v706 = vld [vmem:[#allocation7 + $0x28] sm:$0xf]
    %v707 = vld [vmem:[#allocation7 + $0x2c] sm:$0xf]
    %v708 = vld [vmem:[#allocation7 + $0x30] sm:$0xf]
    %v709 = vld [vmem:[#allocation7 + $0x34] sm:$0xf]
    %v710 = vld [vmem:[#allocation7 + $0x38] sm:$0xf]
    %v711 = vld [vmem:[#allocation7 + $0x3c] sm:$0xf]
    %v712 = vld [vmem:[#allocation7 + $0x40] sm:$0xf]
    %v713 = vld [vmem:[#allocation7 + $0x44] sm:$0xf]
    %v714 = vld [vmem:[#allocation7 + $0x48] sm:$0xf]
    %v715 = vld [vmem:[#allocation7 + $0x4c] sm:$0xf]
    %v716 = vld [vmem:[#allocation7 + $0x50] sm:$0xf]
    %v717 = vld [vmem:[#allocation7 + $0x54] sm:$0xf]
    %v718 = vld [vmem:[#allocation7 + $0x58] sm:$0xf]
    %v719 = vld [vmem:[#allocation7 + $0x5c] sm:$0xf]
    %v720 = vld [vmem:[#allocation7 + $0x60] sm:$0xf]
    %v721 = vld [vmem:[#allocation7 + $0x64] sm:$0xf]
    %v722 = vld [vmem:[#allocation7 + $0x68] sm:$0xf]
    %v723 = vld [vmem:[#allocation7 + $0x6c] sm:$0xf]
    %v724 = vld [vmem:[#allocation7 + $0x70] sm:$0xf]
    %v725 = vld [vmem:[#allocation7 + $0x74] sm:$0xf]
    %v726 = vld [vmem:[#allocation7 + $0x78] sm:$0xf]
    %v727 = vld [vmem:[#allocation7 + $0x7c] sm:$0xf]
    %v728 = vld [vmem:[%s8] sm:$0x1]
    %v730 = vlaneseq
    %v731 = vshrl.u32 %v730, 7
    %v732 = vsub.s32 0, %v731
    %v733 = vrot.slane %v728, %v732
    %v767 = vunpack.c.l.b16 %v696
    %v768 = vunpack.c.l.b16 %v697
    %v769 = vunpack.c.l.b16 %v698
    %v770 = vunpack.c.l.b16 %v699
    %v771 = vunpack.c.l.b16 %v700
    %v772 = vunpack.c.l.b16 %v701
    %v773 = vunpack.c.l.b16 %v702
    %v774 = vunpack.c.l.b16 %v703
    %v775 = vunpack.c.l.b16 %v704
    %v776 = vunpack.c.l.b16 %v705
    %v777 = vunpack.c.l.b16 %v706
    %v778 = vunpack.c.l.b16 %v707
    %v779 = vunpack.c.l.b16 %v708
    %v780 = vunpack.c.l.b16 %v709
    %v781 = vunpack.c.l.b16 %v710
    %v782 = vunpack.c.l.b16 %v711
    %v783 = vunpack.c.l.b16 %v712
    %v784 = vunpack.c.l.b16 %v713
    %v785 = vunpack.c.l.b16 %v714
    %v786 = vunpack.c.l.b16 %v715
    %v787 = vunpack.c.l.b16 %v716
    %v788 = vunpack.c.l.b16 %v717
    %v789 = vunpack.c.l.b16 %v718
    %v790 = vunpack.c.l.b16 %v719
    %v791 = vunpack.c.l.b16 %v720
    %v792 = vunpack.c.l.b16 %v721
    %v793 = vunpack.c.l.b16 %v722
    %v794 = vunpack.c.l.b16 %v723
    %v795 = vunpack.c.l.b16 %v724
    %v796 = vunpack.c.l.b16 %v725
    %v797 = vunpack.c.l.b16 %v726
    %v798 = vunpack.c.l.b16 %v727
    %v799 = vpack.c.b16 %v768, %v767
    %v800 = vpack.c.b16 %v770, %v769
    %v801 = vpack.c.b16 %v772, %v771
    %v802 = vpack.c.b16 %v774, %v773
    %v803 = vpack.c.b16 %v776, %v775
    %v804 = vpack.c.b16 %v778, %v777
    %v805 = vpack.c.b16 %v780, %v779
    %v806 = vpack.c.b16 %v782, %v781
    %v807 = vpack.c.b16 %v784, %v783
    %v808 = vpack.c.b16 %v786, %v785
    %v809 = vpack.c.b16 %v788, %v787
    %v810 = vpack.c.b16 %v790, %v789
    %v811 = vpack.c.b16 %v792, %v791
    %v812 = vpack.c.b16 %v794, %v793
    %v813 = vpack.c.b16 %v796, %v795
    %v814 = vpack.c.b16 %v798, %v797
    %831 = vmatprep.subr.bf16.mxu0 0
    %832 = vmatpush1.bf16.msra.mxu0 %v799
    %833 = vmatprep.subr.bf16.mxu0 0
    %834 = vmatpush1.bf16.msra.mxu0 %v800
    %835 = vmatprep.subr.bf16.mxu0 0
    %836 = vmatpush1.bf16.msra.mxu0 %v801
    %837 = vmatprep.subr.bf16.mxu0 0
    %838 = vmatpush1.bf16.msra.mxu0 %v802
    %839 = vmatprep.subr.bf16.mxu0 0
    %840 = vmatpush1.bf16.msra.mxu0 %v803
    %841 = vmatprep.subr.bf16.mxu0 0
    %842 = vmatpush1.bf16.msra.mxu0 %v804
    %843 = vmatprep.subr.bf16.mxu0 0
    %844 = vmatpush1.bf16.msra.mxu0 %v805
    %845 = vmatprep.subr.bf16.mxu0 0
    %846 = vmatpush1.bf16.msra.mxu0 %v806
    %847 = vmatprep.subr.bf16.mxu0 0
    %848 = vmatpush1.bf16.msra.mxu0 %v807
    %849 = vmatprep.subr.bf16.mxu0 0
    %850 = vmatpush1.bf16.msra.mxu0 %v808
    %851 = vmatprep.subr.bf16.mxu0 0
    %852 = vmatpush1.bf16.msra.mxu0 %v809
    %853 = vmatprep.subr.bf16.mxu0 0
    %854 = vmatpush1.bf16.msra.mxu0 %v810
    %855 = vmatprep.subr.bf16.mxu0 0
    %856 = vmatpush1.bf16.msra.mxu0 %v811
    %857 = vmatprep.subr.bf16.mxu0 0
    %858 = vmatpush1.bf16.msra.mxu0 %v812
    %859 = vmatprep.subr.bf16.mxu0 0
    %860 = vmatpush1.bf16.msra.mxu0 %v813
    %861 = vmatprep.subr.bf16.mxu0 0
    %862 = vmatpush1.bf16.msra.mxu0 %v814
    %863 = vmatprep.mubr.bf16.mxu0 %v695
    %864 = vmatmul.mubr.bf16.gmra.mrb[0].mxu0 %v694
    %v865 = vpop.f32.mrb[0].mxu0
    %v866 = vadd.f32 %v733, %v865
    %v867 = vpop.f32.mrb[0].mxu0
    %v868 = vpop.f32.mrb[0].mxu0
    %v869 = vpop.f32.mrb[0].mxu0
    %870 = vdwg.mxu0
    %v871 = vpack.c.bf16 %v866, %v866
    %872 = vst [vmem:[%s9] sm:$0xf] %v871
    // Predicated region
    $region54: #{_lambda_.1} parent=1 // pred_check
      _
    $region55: #{_lambda_.1} parent=1 // pred_check_branch
      %874 = sbr.rel (0) target = $region57
    $region56: #{_lambda_.1} parent=1 // pred_region
      _
    $region57: #{_lambda_.1} parent=1 // pred_fallthru
      _
    // Predicated region
    $region58: #{_lambda_.1} parent=1 // pred_check
      _
    $region59: #{_lambda_.1} parent=1 // pred_check_branch
      %876 = sbr.rel (0) target = $region61
    $region60: #{_lambda_.1} parent=1 // pred_region
      _
    $region61: #{_lambda_.1} parent=1 // pred_fallthru
      _
    %877 = vsyncpa [#allocation3], 1
    %878 = vsyncpa [#allocation5], 1
    %879 = vsyncpa [#allocation8], 1

</llo_original>
